<compile_context>
chip_gen: v7x
topology: tpu7x:2x2x1
jax: 0.10.0
libtpu: 0.0.40
codegen_flags: <defaults>
</compile_context>

<pallas_src>
import functools
import math

import numpy as np
import jax
import jax.numpy as jnp
from jax import lax
from jax.experimental import pallas as pl
from jax.experimental.pallas import tpu as pltpu


_TARGET_BLOCK_BYTES = 2 * 1024 * 1024   # ~2 MiB f32 block ~= 85%+ of HBM roofline
_VMEM_LIMIT_BYTES = 32 * 1024 * 1024    # safe on v5e/v6e (128 MiB) and v7x (64 MiB)


def _ln_packed_kernel(alpha_ref, bias_ref, seg_ref, x_ref, o_ref, *, h, eps):
    """Lane-dense path: each 128-lane row packs 128//h logical rows of length h.

    seg_ref is the (128,128) block-diagonal ones matrix: seg[k, j] = 1 iff
    lanes k and j belong to the same length-h segment, so x @ seg broadcasts
    each segment's sum to all of its lanes (one MXU matmul, no lane shuffles).
    """
    x = x_ref[...].astype(jnp.float32)            # (tile_p, 128)
    seg = seg_ref[...]                            # (128, 128) f32 zeros/ones

    seg_sum = jnp.dot(x, seg, preferred_element_type=jnp.float32,
                      precision=lax.Precision.HIGHEST)
    mean = seg_sum * (1.0 / h)
    d = x - mean
    seg_ssq = jnp.dot(d * d, seg, preferred_element_type=jnp.float32,
                      precision=lax.Precision.HIGHEST)
    # torch.std uses the unbiased (H-1) estimator; module adds eps to std**2.
    var = seg_ssq * (1.0 / max(h - 1, 1))
    # rsqrt runs on the EUP (otherwise idle VLIW slot); fold alpha into scale.
    scale = alpha_ref[0] * lax.rsqrt(var + eps)
    o_ref[...] = (d * scale + bias_ref[0]).astype(o_ref.dtype)


def _ln_rowwise_kernel(alpha_ref, bias_ref, x_ref, o_ref, *, eps):
    """Fallback path (H does not divide 128): one logical row per block row."""
    x = x_ref[...].astype(jnp.float32)            # (tile_r, H)
    h = x.shape[-1]
    mean = jnp.mean(x, axis=-1, keepdims=True)
    d = x - mean
    var = jnp.sum(d * d, axis=-1, keepdims=True) * (1.0 / max(h - 1, 1))
    scale = alpha_ref[0] * lax.rsqrt(var + eps)   # (tile_r, 1): per-row, EUP
    o_ref[...] = (d * scale + bias_ref[0]).astype(o_ref.dtype)


def _pick_tile_rows(total_rows, f32_bytes_per_row, row_align):
    """Rows per block: ~_TARGET_BLOCK_BYTES of f32 working data, sublane
    aligned, and capped so the grid has >= 2 steps (v7x has 2 TensorCores)."""
    if total_rows <= row_align:
        return total_rows                          # block == full dim (legal)
    tile = (_TARGET_BLOCK_BYTES // f32_bytes_per_row) // row_align * row_align
    tile = max(row_align, tile)
    half = -(-total_rows // 2)                     # ceil(total / 2)
    half = -(-half // row_align) * row_align       # round up to alignment
    return min(tile, max(row_align, half))


def layer_normalization(x, alpha, bias, *, eps=1e-6):
    """Pallas TPU forward of the custom LayerNormalization module.

    x: (..., H) array. alpha, bias: (1,) scalar parameters.
    """
    orig_shape = x.shape
    h = orig_shape[-1]
    rows = math.prod(orig_shape[:-1]) if len(orig_shape) > 1 else 1

    itemsize = jnp.dtype(x.dtype).itemsize
    row_align = max(8, 32 // itemsize)     # 8 rows f32 / 16 bf16 / 32 int8 (packed sublanes)

    compiler_params = pltpu.CompilerParams(
        dimension_semantics=("parallel",),
        vmem_limit_bytes=_VMEM_LIMIT_BYTES,
    )
    smem_spec = pl.BlockSpec(memory_space=pltpu.MemorySpace.SMEM)

    # Lane-dense packing is possible when H divides 128 and rows pack evenly.
    lane_packed = (h <= 128) and (128 % h == 0) and (rows % (128 // h) == 0)

    if lane_packed:
        g = 128 // h
        packed_rows = rows // g
        x2 = x.reshape(packed_rows, 128)           # free row-major view
        seg = jnp.asarray(
            np.kron(np.eye(g, dtype=np.float32), np.ones((h, h), np.float32)))
        tile = _pick_tile_rows(packed_rows, 128 * 4, row_align)  # size vs f32 upcast
        grid = (pl.cdiv(packed_rows, tile),)
        block = (tile, 128)
        out = pl.pallas_call(
            functools.partial(_ln_packed_kernel, h=h, eps=eps),
            out_shape=jax.ShapeDtypeStruct(x2.shape, x.dtype),
            grid=grid,
            in_specs=[
                smem_spec,                                    # alpha (1,)
                smem_spec,                                    # bias  (1,)
                pl.BlockSpec((128, 128), lambda i: (0, 0)),   # segment matrix
                pl.BlockSpec(block, lambda i: (i, 0)),        # x tile
            ],
            out_specs=pl.BlockSpec(block, lambda i: (i, 0)),
            compiler_params=compiler_params,
        )(alpha, bias, seg, x2)
    else:
        # TODO(synk): when H is not a divisor (or multiple) of 128 the last dim
        # is not lane-dense; production shapes should keep H a multiple of 128.
        x2 = x.reshape(rows, h)
        tile = _pick_tile_rows(rows, h * 4, row_align)
        grid = (pl.cdiv(rows, tile),)
        block = (tile, h)
        out = pl.pallas_call(
            functools.partial(_ln_rowwise_kernel, eps=eps),
            out_shape=jax.ShapeDtypeStruct(x2.shape, x.dtype),
            grid=grid,
            in_specs=[
                smem_spec,                                    # alpha (1,)
                smem_spec,                                    # bias  (1,)
                pl.BlockSpec(block, lambda i: (i, 0)),        # x tile
            ],
            out_specs=pl.BlockSpec(block, lambda i: (i, 0)),
            compiler_params=compiler_params,
        )(alpha, bias, x2)

    return out.reshape(orig_shape)


def layer_normalization_ref(x, alpha, bias, eps=1e-6):
    """Pure-JAX reference mirroring the PyTorch forward exactly."""
    x32 = x.astype(jnp.float32)
    mean = jnp.mean(x32, axis=-1, keepdims=True)
    d = x32 - mean
    n = x32.shape[-1]
    var = jnp.sum(d * d, axis=-1, keepdims=True) / max(n - 1, 1)  # torch.std: unbiased
    out = alpha[0] * d / jnp.sqrt(var + eps) + bias[0]
    return out.astype(x.dtype)


def _check(x, alpha, bias, eps, atol, rtol, name):
    out = jax.block_until_ready(layer_normalization(x, alpha, bias, eps=eps))
    ref = layer_normalization_ref(x, alpha, bias, eps=eps)
    assert out.shape == x.shape and out.dtype == x.dtype, name
    ok = jnp.allclose(out.astype(jnp.float32), ref.astype(jnp.float32),
                      atol=atol, rtol=rtol)
    assert ok, f"mismatch vs reference: {name}"


if __name__ == "__main__":
    key = jax.random.PRNGKey(0)
    k0, k1, k2, k3 = jax.random.split(key, 4)
    eps = 1e-6

    # Module init: nn.Parameter(torch.ones(1)) / nn.Parameter(torch.zeros(1)).
    alpha = jnp.ones((1,), dtype=jnp.float32)
    bias = jnp.zeros((1,), dtype=jnp.float32)

    # Primary case: (B, S, H) = (2, 8, 32), lane-packed path.
    x0 = jax.random.normal(k0, (2, 8, 32), dtype=jnp.float32)
    _check(x0, alpha, bias, eps, 1e-4, 1e-4, "f32 (2,8,32) lane-packed")

    # Non-trivial alpha/bias, multi-step grid with a ragged last block.
    alpha2 = jnp.full((1,), 1.5, dtype=jnp.float32)
    bias2 = jnp.full((1,), -0.25, dtype=jnp.float32)
    x1 = jax.random.normal(k1, (1, 100, 32), dtype=jnp.float32)
    _check(x1, alpha2, bias2, eps, 1e-4, 1e-4, "f32 (1,100,32) ragged grid")

    # H not a divisor of 128 -> row-wise fallback path.
    x2 = jax.random.normal(k2, (2, 16, 40), dtype=jnp.float32)
    _check(x2, alpha2, bias2, eps, 1e-4, 1e-4, "f32 (2,16,40) fallback")

    # bf16 input (16-row sublane alignment), lane-packed path.
    x3 = jax.random.normal(k3, (4, 64, 32), dtype=jnp.bfloat16)
    _check(x3, alpha, bias, eps, 5e-2, 2e-2, "bf16 (4,64,32) lane-packed")

    print("KERNEL_OK")
</pallas_src>

<mosaic_0001>
module attributes {stable_mosaic.version = 11 : i64} {
  func.func @_ln_packed_kernel(%arg0: i32, %arg1: memref<1xf32, #tpu.memory_space<smem>>, %arg2: memref<1xf32, #tpu.memory_space<smem>>, %arg3: memref<128x128xf32, #tpu.memory_space<vmem>>, %arg4: memref<4x128xf32, #tpu.memory_space<vmem>>, %arg5: memref<4x128xf32, #tpu.memory_space<vmem>>) attributes {dimension_semantics = [#tpu.dimension_semantics<parallel>], iteration_bounds = array<i64: 1>, scalar_prefetch = 0 : i64, scratch_operands = 0 : i64, tpu.core_type = #tpu.core_type<tc>, window_params = [{transform_indices = @transform_0, window_bounds = array<i64: 1>}, {transform_indices = @transform_1, window_bounds = array<i64: 1>}, {pipeline_mode = #tpu.pipeline_mode<synchronous>, transform_indices = @transform_2, window_bounds = array<i64: 128, 128>}, {transform_indices = @transform_3, window_bounds = array<i64: 4, 128>}, {transform_indices = @transform_4, window_bounds = array<i64: 4, 128>}]} {
    %c0 = arith.constant 0 : index
    %c0_0 = arith.constant 0 : index
    %0 = vector.load %arg4[%c0, %c0_0] : memref<4x128xf32, #tpu.memory_space<vmem>>, vector<4x128xf32>
    %c0_1 = arith.constant 0 : index
    %c0_2 = arith.constant 0 : index
    %1 = vector.load %arg3[%c0_1, %c0_2] : memref<128x128xf32, #tpu.memory_space<vmem>>, vector<128x128xf32>
    %cst = arith.constant dense<0.000000e+00> : vector<4x128xf32>
    %2 = tpu.matmul %0, %1, %cst {dimension_numbers = #tpu.dot_dimension_numbers<[1], [0], [0], [1], [0, 0, 1, 1], [], []>, precision = #tpu.contract_precision<fp32>} : vector<4x128xf32>, vector<128x128xf32>, vector<4x128xf32> -> vector<4x128xf32>
    %cst_3 = arith.constant 3.125000e-02 : f32
    %3 = vector.broadcast %cst_3 : f32 to vector<4x128xf32>
    %4 = arith.mulf %2, %3 : vector<4x128xf32>
    %5 = arith.subf %0, %4 : vector<4x128xf32>
    %6 = arith.mulf %5, %5 : vector<4x128xf32>
    %cst_4 = arith.constant dense<0.000000e+00> : vector<4x128xf32>
    %7 = tpu.matmul %6, %1, %cst_4 {dimension_numbers = #tpu.dot_dimension_numbers<[1], [0], [0], [1], [0, 0, 1, 1], [], []>, precision = #tpu.contract_precision<fp32>} : vector<4x128xf32>, vector<128x128xf32>, vector<4x128xf32> -> vector<4x128xf32>
    %cst_5 = arith.constant 0.0322580636 : f32
    %8 = vector.broadcast %cst_5 : f32 to vector<4x128xf32>
    %9 = arith.mulf %7, %8 : vector<4x128xf32>
    %c0_6 = arith.constant 0 : index
    %10 = memref.load %arg1[%c0_6] : memref<1xf32, #tpu.memory_space<smem>>
    %cst_7 = arith.constant 9.99999997E-7 : f32
    %11 = vector.broadcast %cst_7 : f32 to vector<4x128xf32>
    %12 = arith.addf %9, %11 : vector<4x128xf32>
    %13 = math.rsqrt %12 : vector<4x128xf32>
    %14 = vector.broadcast %10 : f32 to vector<4x128xf32>
    %15 = arith.mulf %14, %13 : vector<4x128xf32>
    %16 = arith.mulf %5, %15 : vector<4x128xf32>
    %c0_8 = arith.constant 0 : index
    %17 = memref.load %arg2[%c0_8] : memref<1xf32, #tpu.memory_space<smem>>
    %18 = vector.broadcast %17 : f32 to vector<4x128xf32>
    %19 = arith.addf %16, %18 : vector<4x128xf32>
    %c0_9 = arith.constant 0 : index
    %c0_10 = arith.constant 0 : index
    %20 = vector.load %arg5[%c0_9, %c0_10] : memref<4x128xf32, #tpu.memory_space<vmem>>, vector<4x128xf32>
    tpu.vector_store %arg5[%c0_9, %c0_10], %19 {strides = array<i32>} : memref<4x128xf32, #tpu.memory_space<vmem>>, vector<4x128xf32>,
    return
  }
  func.func @transform_0(%arg0: i32) -> i32 {
    %c0_i32 = arith.constant 0 : i32
    %c0_i32_0 = arith.constant 0 : i32
    return %c0_i32 : i32
  }
  func.func @transform_1(%arg0: i32) -> i32 {
    %c0_i32 = arith.constant 0 : i32
    %c0_i32_0 = arith.constant 0 : i32
    return %c0_i32 : i32
  }
  func.func @transform_2(%arg0: i32) -> (i32, i32) {
    %c0_i32 = arith.constant 0 : i32
    %c0_i32_0 = arith.constant 0 : i32
    %c0_i32_1 = arith.constant 0 : i32
    return %c0_i32, %c0_i32_0 : i32, i32
  }
  func.func @transform_3(%arg0: i32) -> (i32, i32) {
    %c0_i32 = arith.constant 0 : i32
    %c0_i32_0 = arith.constant 0 : i32
    return %arg0, %c0_i32 : i32, i32
  }
  func.func @transform_4(%arg0: i32) -> (i32, i32) {
    %c0_i32 = arith.constant 0 : i32
    %c0_i32_0 = arith.constant 0 : i32
    return %arg0, %c0_i32 : i32, i32
  }
}

</mosaic_0001>

<llo_original>
// kernel: tpu_custom_call.1
$region0: #{tpu_custom_call.1}
  #allocation0 [shape = 'u32[]', space=smem, size = 0x4, offset = 0x4, fixed_abs, tag = 'smem constant byte address 0x4 - core index']
  #allocation1 [shape = 'u32[144,128]{1,0:T(1,128)}', space=vmem, size = 0x12000, scoped, tag = 'internal scratch']
  #allocation2 [shape = 'f32[1]{0:T(128)S(6)}', space=smem, size = 0x200, scoped, tag = 'scoped memory for tpu_custom_call.1']
  #allocation3 [shape = 'f32[1]{0:T(128)S(6)}', space=smem, size = 0x200, scoped, tag = 'scoped memory for tpu_custom_call.1']
  %s0 = inlined_call_operand.<no memory space> [shape: f32[1], index: 0, kind: input, shape index: {}]
  %s1 = inlined_call_operand.<no memory space> [shape: f32[1], index: 1, kind: input, shape index: {}]
  %s2 = inlined_call_operand.hbm [shape: f32[128,128], index: 2, kind: input, shape index: {}]
  %s3 = inlined_call_operand.vmem [shape: f32[4,128], index: 3, kind: input, shape index: {}]
  %s4 = inlined_call_operand.hbm [shape: f32[4,128], index: 4, kind: output, shape index: {}]
  %s5 = sld [smem:[#allocation0]]
  $region30: #{tpu_custom_call.1} parent=0
    _
  %s7 = ssub.s32 1, %s5
  %s8 = scalar_select 0, %s7, %s5
  %9 = sst [smem:[#allocation2]] %s0
  %10 = sst [smem:[#allocation3]] %s1
  $region1: #{tpu_custom_call.1} parent=0
    #allocation4 [shape = 'u8[65536]{0}', space=vmem, size = 0x10000, scoped, tag = 'input window, operand 2, single buffered']
    #allocation5 [shape = 's32[1]{0}', space=sflag, size = 0x4, scoped, tag = 'scoped memory for tpu_custom_call.1']
    #allocation6 [shape = 's32[1]{0}', space=sflag, size = 0x4, scoped, tag = 'scoped memory for tpu_custom_call.1']
    #allocation7 [shape = 'u8[2048]{0}', space=vmem, size = 0x800, scoped, tag = 'output window, operand 0, single buffered']
    %11 = vsyncpa [#allocation5], 0
    %12 = vsyncpa [#allocation6], 0
    // Predicated region
    $region2: #{tpu_custom_call.1} parent=1 // pred_check
      _
    $region3: #{tpu_custom_call.1} parent=1 // pred_check_branch
      %14 = sbr.rel (0) target = $region5
    $region4: #{tpu_custom_call.1} parent=1 // pred_region
      _
    $region5: #{tpu_custom_call.1} parent=1 // pred_fallthru
      _
    // Predicated region
    $region6: #{tpu_custom_call.1} parent=1 // pred_check
      _
    $region7: #{tpu_custom_call.1} parent=1 // pred_check_branch
      %16 = sbr.rel (0) target = $region9
    $region8: #{tpu_custom_call.1} parent=1 // pred_region
      _
    $region9: #{tpu_custom_call.1} parent=1 // pred_fallthru
      _
    // Predicated region
    $region10: #{tpu_custom_call.1} parent=1 // pred_check
      _
    $region11: #{tpu_custom_call.1} parent=1 // pred_check_branch
      %18 = sbr.rel (0) target = $region13
    $region12: #{tpu_custom_call.1} parent=1 // pred_region
      %s20 = ssub.s32 2048, 2048
      %21 = vsyncadd [#allocation5], %s20
      %s22 = sshll.u32 [#allocation4], 4
      %s23 = int_to_ptr.vmem [resolvable:$true] %s22
      %28 = dma.hbm_to_vmem [thread:$0]  %s2, 2048, %s23, [#allocation5], 128, 128, 8
    $region13: #{tpu_custom_call.1} parent=1 // pred_fallthru
      _
    // Predicated region
    $region14: #{tpu_custom_call.1} parent=1 // pred_check
      _
    $region15: #{tpu_custom_call.1} parent=1 // pred_check_branch
      %30 = sbr.rel (0) target = $region17
    $region16: #{tpu_custom_call.1} parent=1 // pred_region
      _
    $region17: #{tpu_custom_call.1} parent=1 // pred_fallthru
      _
    // Predicated region
    $region18: #{tpu_custom_call.1} parent=1 // pred_check
      _
    $region19: #{tpu_custom_call.1} parent=1 // pred_check_branch
      %32 = sbr.rel (0) target = $region21
    $region20: #{tpu_custom_call.1} parent=1 // pred_region
      %33 = dma.done [#allocation5], 2048
    $region21: #{tpu_custom_call.1} parent=1 // pred_fallthru
      _
    %v34 = vld [vmem:[%s3] sm:$0xf]
    %v35 = vld [vmem:[#allocation4] sm:$0xff]
    %v36 = vld [vmem:[#allocation4 + $0x8] sm:$0xff]
    %v37 = vld [vmem:[#allocation4 + $0x10] sm:$0xff]
    %v38 = vld [vmem:[#allocation4 + $0x18] sm:$0xff]
    %v39 = vld [vmem:[#allocation4 + $0x20] sm:$0xff]
    %v40 = vld [vmem:[#allocation4 + $0x28] sm:$0xff]
    %v41 = vld [vmem:[#allocation4 + $0x30] sm:$0xff]
    %v42 = vld [vmem:[#allocation4 + $0x38] sm:$0xff]
    %v43 = vld [vmem:[#allocation4 + $0x40] sm:$0xff]
    %v44 = vld [vmem:[#allocation4 + $0x48] sm:$0xff]
    %v45 = vld [vmem:[#allocation4 + $0x50] sm:$0xff]
    %v46 = vld [vmem:[#allocation4 + $0x58] sm:$0xff]
    %v47 = vld [vmem:[#allocation4 + $0x60] sm:$0xff]
    %v48 = vld [vmem:[#allocation4 + $0x68] sm:$0xff]
    %v49 = vld [vmem:[#allocation4 + $0x70] sm:$0xff]
    %v50 = vld [vmem:[#allocation4 + $0x78] sm:$0xff]
    %51 = vmatprep.subr.mxu0 0.0
    %v52 = vand.u32 %v35, 4294901760
    %53 = vmatpush1.msra.mxu0 %v52
    %54 = vmatprep.subr.mxu0 0.0
    %v55 = vand.u32 %v36, 4294901760
    %56 = vmatpush1.msra.mxu0 %v55
    %57 = vmatprep.subr.mxu0 0.0
    %v58 = vand.u32 %v37, 4294901760
    %59 = vmatpush1.msra.mxu0 %v58
    %60 = vmatprep.subr.mxu0 0.0
    %v61 = vand.u32 %v38, 4294901760
    %62 = vmatpush1.msra.mxu0 %v61
    %63 = vmatprep.subr.mxu0 0.0
    %v64 = vand.u32 %v39, 4294901760
    %65 = vmatpush1.msra.mxu0 %v64
    %66 = vmatprep.subr.mxu0 0.0
    %v67 = vand.u32 %v40, 4294901760
    %68 = vmatpush1.msra.mxu0 %v67
    %69 = vmatprep.subr.mxu0 0.0
    %v70 = vand.u32 %v41, 4294901760
    %71 = vmatpush1.msra.mxu0 %v70
    %72 = vmatprep.subr.mxu0 0.0
    %v73 = vand.u32 %v42, 4294901760
    %74 = vmatpush1.msra.mxu0 %v73
    %75 = vmatprep.subr.mxu0 0.0
    %v76 = vand.u32 %v43, 4294901760
    %77 = vmatpush1.msra.mxu0 %v76
    %78 = vmatprep.subr.mxu0 0.0
    %v79 = vand.u32 %v44, 4294901760
    %80 = vmatpush1.msra.mxu0 %v79
    %81 = vmatprep.subr.mxu0 0.0
    %v82 = vand.u32 %v45, 4294901760
    %83 = vmatpush1.msra.mxu0 %v82
    %84 = vmatprep.subr.mxu0 0.0
    %v85 = vand.u32 %v46, 4294901760
    %86 = vmatpush1.msra.mxu0 %v85
    %87 = vmatprep.subr.mxu0 0.0
    %v88 = vand.u32 %v47, 4294901760
    %89 = vmatpush1.msra.mxu0 %v88
    %90 = vmatprep.subr.mxu0 0.0
    %v91 = vand.u32 %v48, 4294901760
    %92 = vmatpush1.msra.mxu0 %v91
    %93 = vmatprep.subr.mxu0 0.0
    %v94 = vand.u32 %v49, 4294901760
    %95 = vmatpush1.msra.mxu0 %v94
    %96 = vmatprep.subr.mxu0 0.0
    %v97 = vand.u32 %v50, 4294901760
    %98 = vmatpush1.msra.mxu0 %v97
    %99 = vmatprep.subr.mxu0 0.0
    %100 = vmatpush1.msra.mxu0 0.0
    %101 = vmatprep.subr.mxu0 0.0
    %102 = vmatpush1.msra.mxu0 0.0
    %103 = vmatprep.subr.mxu0 0.0
    %104 = vmatpush1.msra.mxu0 0.0
    %105 = vmatprep.subr.mxu0 0.0
    %106 = vmatpush1.msra.mxu0 0.0
    %107 = vmatprep.subr.mxu0 0.0
    %108 = vmatpush1.msra.mxu0 0.0
    %109 = vmatprep.subr.mxu0 0.0
    %110 = vmatpush1.msra.mxu0 0.0
    %111 = vmatprep.subr.mxu0 0.0
    %112 = vmatpush1.msra.mxu0 0.0
    %113 = vmatprep.subr.mxu0 0.0
    %114 = vmatpush1.msra.mxu0 0.0
    %115 = vmatprep.subr.mxu0 0.0
    %116 = vmatpush1.msra.mxu0 0.0
    %117 = vmatprep.subr.mxu0 0.0
    %118 = vmatpush1.msra.mxu0 0.0
    %119 = vmatprep.subr.mxu0 0.0
    %120 = vmatpush1.msra.mxu0 0.0
    %121 = vmatprep.subr.mxu0 0.0
    %122 = vmatpush1.msra.mxu0 0.0
    %123 = vmatprep.subr.mxu0 0.0
    %124 = vmatpush1.msra.mxu0 0.0
    %125 = vmatprep.subr.mxu0 0.0
    %126 = vmatpush1.msra.mxu0 0.0
    %127 = vmatprep.subr.mxu0 0.0
    %128 = vmatpush1.msra.mxu0 0.0
    %129 = vmatprep.subr.mxu0 0.0
    %130 = vmatpush1.msra.mxu0 0.0
    %131 = vmatprep.mubr.f32.mxu0 0.0
    %v132 = vand.u32 %v34, 4294901760
    %v133 = vsub.f32 %v34, %v132
    %v134 = vand.u32 %v133, 4294901760
    %v135 = vsub.f32 %v133, %v134
    %v136 = vand.u32 %v135, 4294901760
    %137 = vmatmul.mubr.f32.gmra.mrb[0].mxu0 %v136
    %v138 = vpop.f32.mrb[0].mxu0
    %v139 = vadd.f32 0.0, %v138
    %v140 = vpop.f32.mrb[0].mxu0
    %141 = vdwg.mxu0
    %142 = vmatprep.subr.mxu0 0.0
    %v143 = vand.u32 %v35, 4294901760
    %v144 = vsub.f32 %v35, %v143
    %v145 = vand.u32 %v144, 4294901760
    %v146 = vsub.f32 %v144, %v145
    %v147 = vand.u32 %v146, 4294901760
    %148 = vmatpush1.msra.mxu0 %v147
    %149 = vmatprep.subr.mxu0 0.0
    %v150 = vand.u32 %v36, 4294901760
    %v151 = vsub.f32 %v36, %v150
    %v152 = vand.u32 %v151, 4294901760
    %v153 = vsub.f32 %v151, %v152
    %v154 = vand.u32 %v153, 4294901760
    %155 = vmatpush1.msra.mxu0 %v154
    %156 = vmatprep.subr.mxu0 0.0
    %v157 = vand.u32 %v37, 4294901760
    %v158 = vsub.f32 %v37, %v157
    %v159 = vand.u32 %v158, 4294901760
    %v160 = vsub.f32 %v158, %v159
    %v161 = vand.u32 %v160, 4294901760
    %162 = vmatpush1.msra.mxu0 %v161
    %163 = vmatprep.subr.mxu0 0.0
    %v164 = vand.u32 %v38, 4294901760
    %v165 = vsub.f32 %v38, %v164
    %v166 = vand.u32 %v165, 4294901760
    %v167 = vsub.f32 %v165, %v166
    %v168 = vand.u32 %v167, 4294901760
    %169 = vmatpush1.msra.mxu0 %v168
    %170 = vmatprep.subr.mxu0 0.0
    %v171 = vand.u32 %v39, 4294901760
    %v172 = vsub.f32 %v39, %v171
    %v173 = vand.u32 %v172, 4294901760
    %v174 = vsub.f32 %v172, %v173
    %v175 = vand.u32 %v174, 4294901760
    %176 = vmatpush1.msra.mxu0 %v175
    %177 = vmatprep.subr.mxu0 0.0
    %v178 = vand.u32 %v40, 4294901760
    %v179 = vsub.f32 %v40, %v178
    %v180 = vand.u32 %v179, 4294901760
    %v181 = vsub.f32 %v179, %v180
    %v182 = vand.u32 %v181, 4294901760
    %183 = vmatpush1.msra.mxu0 %v182
    %184 = vmatprep.subr.mxu0 0.0
    %v185 = vand.u32 %v41, 4294901760
    %v186 = vsub.f32 %v41, %v185
    %v187 = vand.u32 %v186, 4294901760
    %v188 = vsub.f32 %v186, %v187
    %v189 = vand.u32 %v188, 4294901760
    %190 = vmatpush1.msra.mxu0 %v189
    %191 = vmatprep.subr.mxu0 0.0
    %v192 = vand.u32 %v42, 4294901760
    %v193 = vsub.f32 %v42, %v192
    %v194 = vand.u32 %v193, 4294901760
    %v195 = vsub.f32 %v193, %v194
    %v196 = vand.u32 %v195, 4294901760
    %197 = vmatpush1.msra.mxu0 %v196
    %198 = vmatprep.subr.mxu0 0.0
    %v199 = vand.u32 %v43, 4294901760
    %v200 = vsub.f32 %v43, %v199
    %v201 = vand.u32 %v200, 4294901760
    %v202 = vsub.f32 %v200, %v201
    %v203 = vand.u32 %v202, 4294901760
    %204 = vmatpush1.msra.mxu0 %v203
    %205 = vmatprep.subr.mxu0 0.0
    %v206 = vand.u32 %v44, 4294901760
    %v207 = vsub.f32 %v44, %v206
    %v208 = vand.u32 %v207, 4294901760
    %v209 = vsub.f32 %v207, %v208
    %v210 = vand.u32 %v209, 4294901760
    %211 = vmatpush1.msra.mxu0 %v210
    %212 = vmatprep.subr.mxu0 0.0
    %v213 = vand.u32 %v45, 4294901760
    %v214 = vsub.f32 %v45, %v213
    %v215 = vand.u32 %v214, 4294901760
    %v216 = vsub.f32 %v214, %v215
    %v217 = vand.u32 %v216, 4294901760
    %218 = vmatpush1.msra.mxu0 %v217
    %219 = vmatprep.subr.mxu0 0.0
    %v220 = vand.u32 %v46, 4294901760
    %v221 = vsub.f32 %v46, %v220
    %v222 = vand.u32 %v221, 4294901760
    %v223 = vsub.f32 %v221, %v222
    %v224 = vand.u32 %v223, 4294901760
    %225 = vmatpush1.msra.mxu0 %v224
    %226 = vmatprep.subr.mxu0 0.0
    %v227 = vand.u32 %v47, 4294901760
    %v228 = vsub.f32 %v47, %v227
    %v229 = vand.u32 %v228, 4294901760
    %v230 = vsub.f32 %v228, %v229
    %v231 = vand.u32 %v230, 4294901760
    %232 = vmatpush1.msra.mxu0 %v231
    %233 = vmatprep.subr.mxu0 0.0
    %v234 = vand.u32 %v48, 4294901760
    %v235 = vsub.f32 %v48, %v234
    %v236 = vand.u32 %v235, 4294901760
    %v237 = vsub.f32 %v235, %v236
    %v238 = vand.u32 %v237, 4294901760
    %239 = vmatpush1.msra.mxu0 %v238
    %240 = vmatprep.subr.mxu0 0.0
    %v241 = vand.u32 %v49, 4294901760
    %v242 = vsub.f32 %v49, %v241
    %v243 = vand.u32 %v242, 4294901760
    %v244 = vsub.f32 %v242, %v243
    %v245 = vand.u32 %v244, 4294901760
    %246 = vmatpush1.msra.mxu0 %v245
    %247 = vmatprep.subr.mxu0 0.0
    %v248 = vand.u32 %v50, 4294901760
    %v249 = vsub.f32 %v50, %v248
    %v250 = vand.u32 %v249, 4294901760
    %v251 = vsub.f32 %v249, %v250
    %v252 = vand.u32 %v251, 4294901760
    %253 = vmatpush1.msra.mxu0 %v252
    %254 = vmatprep.subr.mxu0 0.0
    %255 = vmatpush1.msra.mxu0 0.0
    %256 = vmatprep.subr.mxu0 0.0
    %257 = vmatpush1.msra.mxu0 0.0
    %258 = vmatprep.subr.mxu0 0.0
    %259 = vmatpush1.msra.mxu0 0.0
    %260 = vmatprep.subr.mxu0 0.0
    %261 = vmatpush1.msra.mxu0 0.0
    %262 = vmatprep.subr.mxu0 0.0
    %263 = vmatpush1.msra.mxu0 0.0
    %264 = vmatprep.subr.mxu0 0.0
    %265 = vmatpush1.msra.mxu0 0.0
    %266 = vmatprep.subr.mxu0 0.0
    %267 = vmatpush1.msra.mxu0 0.0
    %268 = vmatprep.subr.mxu0 0.0
    %269 = vmatpush1.msra.mxu0 0.0
    %270 = vmatprep.subr.mxu0 0.0
    %271 = vmatpush1.msra.mxu0 0.0
    %272 = vmatprep.subr.mxu0 0.0
    %273 = vmatpush1.msra.mxu0 0.0
    %274 = vmatprep.subr.mxu0 0.0
    %275 = vmatpush1.msra.mxu0 0.0
    %276 = vmatprep.subr.mxu0 0.0
    %277 = vmatpush1.msra.mxu0 0.0
    %278 = vmatprep.subr.mxu0 0.0
    %279 = vmatpush1.msra.mxu0 0.0
    %280 = vmatprep.subr.mxu0 0.0
    %281 = vmatpush1.msra.mxu0 0.0
    %282 = vmatprep.subr.mxu0 0.0
    %283 = vmatpush1.msra.mxu0 0.0
    %284 = vmatprep.subr.mxu0 0.0
    %285 = vmatpush1.msra.mxu0 0.0
    %286 = vmatprep.mubr.f32.mxu0 0.0
    %v287 = vand.u32 %v34, 4294901760
    %288 = vmatmul.mubr.f32.gmra.mrb[0].mxu0 %v287
    %v289 = vpop.f32.mrb[0].mxu0
    %v290 = vadd.f32 %v139, %v289
    %v291 = vpop.f32.mrb[0].mxu0
    %292 = vdwg.mxu0
    %293 = vmatprep.subr.mxu0 0.0
    %v294 = vand.u32 %v35, 4294901760
    %v295 = vsub.f32 %v35, %v294
    %296 = vmatpush1.msra.mxu0 %v295
    %297 = vmatprep.subr.mxu0 0.0
    %v298 = vand.u32 %v36, 4294901760
    %v299 = vsub.f32 %v36, %v298
    %300 = vmatpush1.msra.mxu0 %v299
    %301 = vmatprep.subr.mxu0 0.0
    %v302 = vand.u32 %v37, 4294901760
    %v303 = vsub.f32 %v37, %v302
    %304 = vmatpush1.msra.mxu0 %v303
    %305 = vmatprep.subr.mxu0 0.0
    %v306 = vand.u32 %v38, 4294901760
    %v307 = vsub.f32 %v38, %v306
    %308 = vmatpush1.msra.mxu0 %v307
    %309 = vmatprep.subr.mxu0 0.0
    %v310 = vand.u32 %v39, 4294901760
    %v311 = vsub.f32 %v39, %v310
    %312 = vmatpush1.msra.mxu0 %v311
    %313 = vmatprep.subr.mxu0 0.0
    %v314 = vand.u32 %v40, 4294901760
    %v315 = vsub.f32 %v40, %v314
    %316 = vmatpush1.msra.mxu0 %v315
    %317 = vmatprep.subr.mxu0 0.0
    %v318 = vand.u32 %v41, 4294901760
    %v319 = vsub.f32 %v41, %v318
    %320 = vmatpush1.msra.mxu0 %v319
    %321 = vmatprep.subr.mxu0 0.0
    %v322 = vand.u32 %v42, 4294901760
    %v323 = vsub.f32 %v42, %v322
    %324 = vmatpush1.msra.mxu0 %v323
    %325 = vmatprep.subr.mxu0 0.0
    %v326 = vand.u32 %v43, 4294901760
    %v327 = vsub.f32 %v43, %v326
    %328 = vmatpush1.msra.mxu0 %v327
    %329 = vmatprep.subr.mxu0 0.0
    %v330 = vand.u32 %v44, 4294901760
    %v331 = vsub.f32 %v44, %v330
    %332 = vmatpush1.msra.mxu0 %v331
    %333 = vmatprep.subr.mxu0 0.0
    %v334 = vand.u32 %v45, 4294901760
    %v335 = vsub.f32 %v45, %v334
    %336 = vmatpush1.msra.mxu0 %v335
    %337 = vmatprep.subr.mxu0 0.0
    %v338 = vand.u32 %v46, 4294901760
    %v339 = vsub.f32 %v46, %v338
    %340 = vmatpush1.msra.mxu0 %v339
    %341 = vmatprep.subr.mxu0 0.0
    %v342 = vand.u32 %v47, 4294901760
    %v343 = vsub.f32 %v47, %v342
    %344 = vmatpush1.msra.mxu0 %v343
    %345 = vmatprep.subr.mxu0 0.0
    %v346 = vand.u32 %v48, 4294901760
    %v347 = vsub.f32 %v48, %v346
    %348 = vmatpush1.msra.mxu0 %v347
    %349 = vmatprep.subr.mxu0 0.0
    %v350 = vand.u32 %v49, 4294901760
    %v351 = vsub.f32 %v49, %v350
    %352 = vmatpush1.msra.mxu0 %v351
    %353 = vmatprep.subr.mxu0 0.0
    %v354 = vand.u32 %v50, 4294901760
    %v355 = vsub.f32 %v50, %v354
    %356 = vmatpush1.msra.mxu0 %v355
    %357 = vmatprep.subr.mxu0 0.0
    %358 = vmatpush1.msra.mxu0 0.0
    %359 = vmatprep.subr.mxu0 0.0
    %360 = vmatpush1.msra.mxu0 0.0
    %361 = vmatprep.subr.mxu0 0.0
    %362 = vmatpush1.msra.mxu0 0.0
    %363 = vmatprep.subr.mxu0 0.0
    %364 = vmatpush1.msra.mxu0 0.0
    %365 = vmatprep.subr.mxu0 0.0
    %366 = vmatpush1.msra.mxu0 0.0
    %367 = vmatprep.subr.mxu0 0.0
    %368 = vmatpush1.msra.mxu0 0.0
    %369 = vmatprep.subr.mxu0 0.0
    %370 = vmatpush1.msra.mxu0 0.0
    %371 = vmatprep.subr.mxu0 0.0
    %372 = vmatpush1.msra.mxu0 0.0
    %373 = vmatprep.subr.mxu0 0.0
    %374 = vmatpush1.msra.mxu0 0.0
    %375 = vmatprep.subr.mxu0 0.0
    %376 = vmatpush1.msra.mxu0 0.0
    %377 = vmatprep.subr.mxu0 0.0
    %378 = vmatpush1.msra.mxu0 0.0
    %379 = vmatprep.subr.mxu0 0.0
    %380 = vmatpush1.msra.mxu0 0.0
    %381 = vmatprep.subr.mxu0 0.0
    %382 = vmatpush1.msra.mxu0 0.0
    %383 = vmatprep.subr.mxu0 0.0
    %384 = vmatpush1.msra.mxu0 0.0
    %385 = vmatprep.subr.mxu0 0.0
    %386 = vmatpush1.msra.mxu0 0.0
    %387 = vmatprep.subr.mxu0 0.0
    %388 = vmatpush1.msra.mxu0 0.0
    %389 = vmatprep.mubr.f32.mxu0 0.0
    %v390 = vand.u32 %v34, 4294901760
    %v391 = vsub.f32 %v34, %v390
    %392 = vmatmul.mubr.f32.gmra.mrb[0].mxu0 %v391
    %v393 = vpop.f32.mrb[0].mxu0
    %v394 = vadd.f32 %v290, %v393
    %v395 = vpop.f32.mrb[0].mxu0
    %396 = vdwg.mxu0
    %397 = vmatprep.subr.mxu0 0.0
    %v398 = vand.u32 %v35, 4294901760
    %399 = vmatpush1.msra.mxu0 %v398
    %400 = vmatprep.subr.mxu0 0.0
    %v401 = vand.u32 %v36, 4294901760
    %402 = vmatpush1.msra.mxu0 %v401
    %403 = vmatprep.subr.mxu0 0.0
    %v404 = vand.u32 %v37, 4294901760
    %405 = vmatpush1.msra.mxu0 %v404
    %406 = vmatprep.subr.mxu0 0.0
    %v407 = vand.u32 %v38, 4294901760
    %408 = vmatpush1.msra.mxu0 %v407
    %409 = vmatprep.subr.mxu0 0.0
    %v410 = vand.u32 %v39, 4294901760
    %411 = vmatpush1.msra.mxu0 %v410
    %412 = vmatprep.subr.mxu0 0.0
    %v413 = vand.u32 %v40, 4294901760
    %414 = vmatpush1.msra.mxu0 %v413
    %415 = vmatprep.subr.mxu0 0.0
    %v416 = vand.u32 %v41, 4294901760
    %417 = vmatpush1.msra.mxu0 %v416
    %418 = vmatprep.subr.mxu0 0.0
    %v419 = vand.u32 %v42, 4294901760
    %420 = vmatpush1.msra.mxu0 %v419
    %421 = vmatprep.subr.mxu0 0.0
    %v422 = vand.u32 %v43, 4294901760
    %423 = vmatpush1.msra.mxu0 %v422
    %424 = vmatprep.subr.mxu0 0.0
    %v425 = vand.u32 %v44, 4294901760
    %426 = vmatpush1.msra.mxu0 %v425
    %427 = vmatprep.subr.mxu0 0.0
    %v428 = vand.u32 %v45, 4294901760
    %429 = vmatpush1.msra.mxu0 %v428
    %430 = vmatprep.subr.mxu0 0.0
    %v431 = vand.u32 %v46, 4294901760
    %432 = vmatpush1.msra.mxu0 %v431
    %433 = vmatprep.subr.mxu0 0.0
    %v434 = vand.u32 %v47, 4294901760
    %435 = vmatpush1.msra.mxu0 %v434
    %436 = vmatprep.subr.mxu0 0.0
    %v437 = vand.u32 %v48, 4294901760
    %438 = vmatpush1.msra.mxu0 %v437
    %439 = vmatprep.subr.mxu0 0.0
    %v440 = vand.u32 %v49, 4294901760
    %441 = vmatpush1.msra.mxu0 %v440
    %442 = vmatprep.subr.mxu0 0.0
    %v443 = vand.u32 %v50, 4294901760
    %444 = vmatpush1.msra.mxu0 %v443
    %445 = vmatprep.subr.mxu0 0.0
    %446 = vmatpush1.msra.mxu0 0.0
    %447 = vmatprep.subr.mxu0 0.0
    %448 = vmatpush1.msra.mxu0 0.0
    %449 = vmatprep.subr.mxu0 0.0
    %450 = vmatpush1.msra.mxu0 0.0
    %451 = vmatprep.subr.mxu0 0.0
    %452 = vmatpush1.msra.mxu0 0.0
    %453 = vmatprep.subr.mxu0 0.0
    %454 = vmatpush1.msra.mxu0 0.0
    %455 = vmatprep.subr.mxu0 0.0
    %456 = vmatpush1.msra.mxu0 0.0
    %457 = vmatprep.subr.mxu0 0.0
    %458 = vmatpush1.msra.mxu0 0.0
    %459 = vmatprep.subr.mxu0 0.0
    %460 = vmatpush1.msra.mxu0 0.0
    %461 = vmatprep.subr.mxu0 0.0
    %462 = vmatpush1.msra.mxu0 0.0
    %463 = vmatprep.subr.mxu0 0.0
    %464 = vmatpush1.msra.mxu0 0.0
    %465 = vmatprep.subr.mxu0 0.0
    %466 = vmatpush1.msra.mxu0 0.0
    %467 = vmatprep.subr.mxu0 0.0
    %468 = vmatpush1.msra.mxu0 0.0
    %469 = vmatprep.subr.mxu0 0.0
    %470 = vmatpush1.msra.mxu0 0.0
    %471 = vmatprep.subr.mxu0 0.0
    %472 = vmatpush1.msra.mxu0 0.0
    %473 = vmatprep.subr.mxu0 0.0
    %474 = vmatpush1.msra.mxu0 0.0
    %475 = vmatprep.subr.mxu0 0.0
    %476 = vmatpush1.msra.mxu0 0.0
    %477 = vmatprep.mubr.f32.mxu0 0.0
    %v478 = vand.u32 %v34, 4294901760
    %v479 = vsub.f32 %v34, %v478
    %v480 = vand.u32 %v479, 4294901760
    %481 = vmatmul.mubr.f32.gmra.mrb[0].mxu0 %v480
    %v482 = vpop.f32.mrb[0].mxu0
    %v483 = vadd.f32 %v394, %v482
    %v484 = vpop.f32.mrb[0].mxu0
    %485 = vdwg.mxu0
    %486 = vmatprep.subr.mxu0 0.0
    %v487 = vand.u32 %v35, 4294901760
    %v488 = vsub.f32 %v35, %v487
    %v489 = vand.u32 %v488, 4294901760
    %490 = vmatpush1.msra.mxu0 %v489
    %491 = vmatprep.subr.mxu0 0.0
    %v492 = vand.u32 %v36, 4294901760
    %v493 = vsub.f32 %v36, %v492
    %v494 = vand.u32 %v493, 4294901760
    %495 = vmatpush1.msra.mxu0 %v494
    %496 = vmatprep.subr.mxu0 0.0
    %v497 = vand.u32 %v37, 4294901760
    %v498 = vsub.f32 %v37, %v497
    %v499 = vand.u32 %v498, 4294901760
    %500 = vmatpush1.msra.mxu0 %v499
    %501 = vmatprep.subr.mxu0 0.0
    %v502 = vand.u32 %v38, 4294901760
    %v503 = vsub.f32 %v38, %v502
    %v504 = vand.u32 %v503, 4294901760
    %505 = vmatpush1.msra.mxu0 %v504
    %506 = vmatprep.subr.mxu0 0.0
    %v507 = vand.u32 %v39, 4294901760
    %v508 = vsub.f32 %v39, %v507
    %v509 = vand.u32 %v508, 4294901760
    %510 = vmatpush1.msra.mxu0 %v509
    %511 = vmatprep.subr.mxu0 0.0
    %v512 = vand.u32 %v40, 4294901760
    %v513 = vsub.f32 %v40, %v512
    %v514 = vand.u32 %v513, 4294901760
    %515 = vmatpush1.msra.mxu0 %v514
    %516 = vmatprep.subr.mxu0 0.0
    %v517 = vand.u32 %v41, 4294901760
    %v518 = vsub.f32 %v41, %v517
    %v519 = vand.u32 %v518, 4294901760
    %520 = vmatpush1.msra.mxu0 %v519
    %521 = vmatprep.subr.mxu0 0.0
    %v522 = vand.u32 %v42, 4294901760
    %v523 = vsub.f32 %v42, %v522
    %v524 = vand.u32 %v523, 4294901760
    %525 = vmatpush1.msra.mxu0 %v524
    %526 = vmatprep.subr.mxu0 0.0
    %v527 = vand.u32 %v43, 4294901760
    %v528 = vsub.f32 %v43, %v527
    %v529 = vand.u32 %v528, 4294901760
    %530 = vmatpush1.msra.mxu0 %v529
    %531 = vmatprep.subr.mxu0 0.0
    %v532 = vand.u32 %v44, 4294901760
    %v533 = vsub.f32 %v44, %v532
    %v534 = vand.u32 %v533, 4294901760
    %535 = vmatpush1.msra.mxu0 %v534
    %536 = vmatprep.subr.mxu0 0.0
    %v537 = vand.u32 %v45, 4294901760
    %v538 = vsub.f32 %v45, %v537
    %v539 = vand.u32 %v538, 4294901760
    %540 = vmatpush1.msra.mxu0 %v539
    %541 = vmatprep.subr.mxu0 0.0
    %v542 = vand.u32 %v46, 4294901760
    %v543 = vsub.f32 %v46, %v542
    %v544 = vand.u32 %v543, 4294901760
    %545 = vmatpush1.msra.mxu0 %v544
    %546 = vmatprep.subr.mxu0 0.0
    %v547 = vand.u32 %v47, 4294901760
    %v548 = vsub.f32 %v47, %v547
    %v549 = vand.u32 %v548, 4294901760
    %550 = vmatpush1.msra.mxu0 %v549
    %551 = vmatprep.subr.mxu0 0.0
    %v552 = vand.u32 %v48, 4294901760
    %v553 = vsub.f32 %v48, %v552
    %v554 = vand.u32 %v553, 4294901760
    %555 = vmatpush1.msra.mxu0 %v554
    %556 = vmatprep.subr.mxu0 0.0
    %v557 = vand.u32 %v49, 4294901760
    %v558 = vsub.f32 %v49, %v557
    %v559 = vand.u32 %v558, 4294901760
    %560 = vmatpush1.msra.mxu0 %v559
    %561 = vmatprep.subr.mxu0 0.0
    %v562 = vand.u32 %v50, 4294901760
    %v563 = vsub.f32 %v50, %v562
    %v564 = vand.u32 %v563, 4294901760
    %565 = vmatpush1.msra.mxu0 %v564
    %566 = vmatprep.subr.mxu0 0.0
    %567 = vmatpush1.msra.mxu0 0.0
    %568 = vmatprep.subr.mxu0 0.0
    %569 = vmatpush1.msra.mxu0 0.0
    %570 = vmatprep.subr.mxu0 0.0
    %571 = vmatpush1.msra.mxu0 0.0
    %572 = vmatprep.subr.mxu0 0.0
    %573 = vmatpush1.msra.mxu0 0.0
    %574 = vmatprep.subr.mxu0 0.0
    %575 = vmatpush1.msra.mxu0 0.0
    %576 = vmatprep.subr.mxu0 0.0
    %577 = vmatpush1.msra.mxu0 0.0
    %578 = vmatprep.subr.mxu0 0.0
    %579 = vmatpush1.msra.mxu0 0.0
    %580 = vmatprep.subr.mxu0 0.0
    %581 = vmatpush1.msra.mxu0 0.0
    %582 = vmatprep.subr.mxu0 0.0
    %583 = vmatpush1.msra.mxu0 0.0
    %584 = vmatprep.subr.mxu0 0.0
    %585 = vmatpush1.msra.mxu0 0.0
    %586 = vmatprep.subr.mxu0 0.0
    %587 = vmatpush1.msra.mxu0 0.0
    %588 = vmatprep.subr.mxu0 0.0
    %589 = vmatpush1.msra.mxu0 0.0
    %590 = vmatprep.subr.mxu0 0.0
    %591 = vmatpush1.msra.mxu0 0.0
    %592 = vmatprep.subr.mxu0 0.0
    %593 = vmatpush1.msra.mxu0 0.0
    %594 = vmatprep.subr.mxu0 0.0
    %595 = vmatpush1.msra.mxu0 0.0
    %596 = vmatprep.subr.mxu0 0.0
    %597 = vmatpush1.msra.mxu0 0.0
    %598 = vmatprep.mubr.f32.mxu0 0.0
    %v599 = vand.u32 %v34, 4294901760
    %600 = vmatmul.mubr.f32.gmra.mrb[0].mxu0 %v599
    %v601 = vpop.f32.mrb[0].mxu0
    %v602 = vadd.f32 %v483, %v601
    %v603 = vpop.f32.mrb[0].mxu0
    %604 = vdwg.mxu0
    %605 = vmatprep.subr.mxu0 0.0
    %v606 = vand.u32 %v35, 4294901760
    %607 = vmatpush1.msra.mxu0 %v606
    %608 = vmatprep.subr.mxu0 0.0
    %v609 = vand.u32 %v36, 4294901760
    %610 = vmatpush1.msra.mxu0 %v609
    %611 = vmatprep.subr.mxu0 0.0
    %v612 = vand.u32 %v37, 4294901760
    %613 = vmatpush1.msra.mxu0 %v612
    %614 = vmatprep.subr.mxu0 0.0
    %v615 = vand.u32 %v38, 4294901760
    %616 = vmatpush1.msra.mxu0 %v615
    %617 = vmatprep.subr.mxu0 0.0
    %v618 = vand.u32 %v39, 4294901760
    %619 = vmatpush1.msra.mxu0 %v618
    %620 = vmatprep.subr.mxu0 0.0
    %v621 = vand.u32 %v40, 4294901760
    %622 = vmatpush1.msra.mxu0 %v621
    %623 = vmatprep.subr.mxu0 0.0
    %v624 = vand.u32 %v41, 4294901760
    %625 = vmatpush1.msra.mxu0 %v624
    %626 = vmatprep.subr.mxu0 0.0
    %v627 = vand.u32 %v42, 4294901760
    %628 = vmatpush1.msra.mxu0 %v627
    %629 = vmatprep.subr.mxu0 0.0
    %v630 = vand.u32 %v43, 4294901760
    %631 = vmatpush1.msra.mxu0 %v630
    %632 = vmatprep.subr.mxu0 0.0
    %v633 = vand.u32 %v44, 4294901760
    %634 = vmatpush1.msra.mxu0 %v633
    %635 = vmatprep.subr.mxu0 0.0
    %v636 = vand.u32 %v45, 4294901760
    %637 = vmatpush1.msra.mxu0 %v636
    %638 = vmatprep.subr.mxu0 0.0
    %v639 = vand.u32 %v46, 4294901760
    %640 = vmatpush1.msra.mxu0 %v639
    %641 = vmatprep.subr.mxu0 0.0
    %v642 = vand.u32 %v47, 4294901760
    %643 = vmatpush1.msra.mxu0 %v642
    %644 = vmatprep.subr.mxu0 0.0
    %v645 = vand.u32 %v48, 4294901760
    %646 = vmatpush1.msra.mxu0 %v645
    %647 = vmatprep.subr.mxu0 0.0
    %v648 = vand.u32 %v49, 4294901760
    %649 = vmatpush1.msra.mxu0 %v648
    %650 = vmatprep.subr.mxu0 0.0
    %v651 = vand.u32 %v50, 4294901760
    %652 = vmatpush1.msra.mxu0 %v651
    %653 = vmatprep.subr.mxu0 0.0
    %654 = vmatpush1.msra.mxu0 0.0
    %655 = vmatprep.subr.mxu0 0.0
    %656 = vmatpush1.msra.mxu0 0.0
    %657 = vmatprep.subr.mxu0 0.0
    %658 = vmatpush1.msra.mxu0 0.0
    %659 = vmatprep.subr.mxu0 0.0
    %660 = vmatpush1.msra.mxu0 0.0
    %661 = vmatprep.subr.mxu0 0.0
    %662 = vmatpush1.msra.mxu0 0.0
    %663 = vmatprep.subr.mxu0 0.0
    %664 = vmatpush1.msra.mxu0 0.0
    %665 = vmatprep.subr.mxu0 0.0
    %666 = vmatpush1.msra.mxu0 0.0
    %667 = vmatprep.subr.mxu0 0.0
    %668 = vmatpush1.msra.mxu0 0.0
    %669 = vmatprep.subr.mxu0 0.0
    %670 = vmatpush1.msra.mxu0 0.0
    %671 = vmatprep.subr.mxu0 0.0
    %672 = vmatpush1.msra.mxu0 0.0
    %673 = vmatprep.subr.mxu0 0.0
    %674 = vmatpush1.msra.mxu0 0.0
    %675 = vmatprep.subr.mxu0 0.0
    %676 = vmatpush1.msra.mxu0 0.0
    %677 = vmatprep.subr.mxu0 0.0
    %678 = vmatpush1.msra.mxu0 0.0
    %679 = vmatprep.subr.mxu0 0.0
    %680 = vmatpush1.msra.mxu0 0.0
    %681 = vmatprep.subr.mxu0 0.0
    %682 = vmatpush1.msra.mxu0 0.0
    %683 = vmatprep.subr.mxu0 0.0
    %684 = vmatpush1.msra.mxu0 0.0
    %685 = vmatprep.mubr.f32.mxu0 0.0
    %v686 = vand.u32 %v34, 4294901760
    %687 = vmatmul.mubr.f32.gmra.mrb[0].mxu0 %v686
    %v688 = vpop.f32.mrb[0].mxu0
    %v689 = vadd.f32 %v602, %v688
    %v690 = vpop.f32.mrb[0].mxu0
    %691 = vdwg.mxu0
    %v692 = vmul.f32 %v689, 0.03125
    %v693 = vsub.f32 %v34, %v692
    %v694 = vmul.f32 %v693, %v693
    %695 = vmatprep.subr.mxu0 0.0
    %v696 = vand.u32 %v35, 4294901760
    %697 = vmatpush1.msra.mxu0 %v696
    %698 = vmatprep.subr.mxu0 0.0
    %v699 = vand.u32 %v36, 4294901760
    %700 = vmatpush1.msra.mxu0 %v699
    %701 = vmatprep.subr.mxu0 0.0
    %v702 = vand.u32 %v37, 4294901760
    %703 = vmatpush1.msra.mxu0 %v702
    %704 = vmatprep.subr.mxu0 0.0
    %v705 = vand.u32 %v38, 4294901760
    %706 = vmatpush1.msra.mxu0 %v705
    %707 = vmatprep.subr.mxu0 0.0
    %v708 = vand.u32 %v39, 4294901760
    %709 = vmatpush1.msra.mxu0 %v708
    %710 = vmatprep.subr.mxu0 0.0
    %v711 = vand.u32 %v40, 4294901760
    %712 = vmatpush1.msra.mxu0 %v711
    %713 = vmatprep.subr.mxu0 0.0
    %v714 = vand.u32 %v41, 4294901760
    %715 = vmatpush1.msra.mxu0 %v714
    %716 = vmatprep.subr.mxu0 0.0
    %v717 = vand.u32 %v42, 4294901760
    %718 = vmatpush1.msra.mxu0 %v717
    %719 = vmatprep.subr.mxu0 0.0
    %v720 = vand.u32 %v43, 4294901760
    %721 = vmatpush1.msra.mxu0 %v720
    %722 = vmatprep.subr.mxu0 0.0
    %v723 = vand.u32 %v44, 4294901760
    %724 = vmatpush1.msra.mxu0 %v723
    %725 = vmatprep.subr.mxu0 0.0
    %v726 = vand.u32 %v45, 4294901760
    %727 = vmatpush1.msra.mxu0 %v726
    %728 = vmatprep.subr.mxu0 0.0
    %v729 = vand.u32 %v46, 4294901760
    %730 = vmatpush1.msra.mxu0 %v729
    %731 = vmatprep.subr.mxu0 0.0
    %v732 = vand.u32 %v47, 4294901760
    %733 = vmatpush1.msra.mxu0 %v732
    %734 = vmatprep.subr.mxu0 0.0
    %v735 = vand.u32 %v48, 4294901760
    %736 = vmatpush1.msra.mxu0 %v735
    %737 = vmatprep.subr.mxu0 0.0
    %v738 = vand.u32 %v49, 4294901760
    %739 = vmatpush1.msra.mxu0 %v738
    %740 = vmatprep.subr.mxu0 0.0
    %v741 = vand.u32 %v50, 4294901760
    %742 = vmatpush1.msra.mxu0 %v741
    %743 = vmatprep.subr.mxu0 0.0
    %744 = vmatpush1.msra.mxu0 0.0
    %745 = vmatprep.subr.mxu0 0.0
    %746 = vmatpush1.msra.mxu0 0.0
    %747 = vmatprep.subr.mxu0 0.0
    %748 = vmatpush1.msra.mxu0 0.0
    %749 = vmatprep.subr.mxu0 0.0
    %750 = vmatpush1.msra.mxu0 0.0
    %751 = vmatprep.subr.mxu0 0.0
    %752 = vmatpush1.msra.mxu0 0.0
    %753 = vmatprep.subr.mxu0 0.0
    %754 = vmatpush1.msra.mxu0 0.0
    %755 = vmatprep.subr.mxu0 0.0
    %756 = vmatpush1.msra.mxu0 0.0
    %757 = vmatprep.subr.mxu0 0.0
    %758 = vmatpush1.msra.mxu0 0.0
    %759 = vmatprep.subr.mxu0 0.0
    %760 = vmatpush1.msra.mxu0 0.0
    %761 = vmatprep.subr.mxu0 0.0
    %762 = vmatpush1.msra.mxu0 0.0
    %763 = vmatprep.subr.mxu0 0.0
    %764 = vmatpush1.msra.mxu0 0.0
    %765 = vmatprep.subr.mxu0 0.0
    %766 = vmatpush1.msra.mxu0 0.0
    %767 = vmatprep.subr.mxu0 0.0
    %768 = vmatpush1.msra.mxu0 0.0
    %769 = vmatprep.subr.mxu0 0.0
    %770 = vmatpush1.msra.mxu0 0.0
    %771 = vmatprep.subr.mxu0 0.0
    %772 = vmatpush1.msra.mxu0 0.0
    %773 = vmatprep.subr.mxu0 0.0
    %774 = vmatpush1.msra.mxu0 0.0
    %775 = vmatprep.mubr.f32.mxu0 0.0
    %v776 = vand.u32 %v694, 4294901760
    %v777 = vsub.f32 %v694, %v776
    %v778 = vand.u32 %v777, 4294901760
    %v779 = vsub.f32 %v777, %v778
    %v780 = vand.u32 %v779, 4294901760
    %781 = vmatmul.mubr.f32.gmra.mrb[0].mxu0 %v780
    %v782 = vpop.f32.mrb[0].mxu0
    %v783 = vadd.f32 0.0, %v782
    %v784 = vpop.f32.mrb[0].mxu0
    %785 = vdwg.mxu0
    %786 = vmatprep.subr.mxu0 0.0
    %v787 = vand.u32 %v35, 4294901760
    %v788 = vsub.f32 %v35, %v787
    %v789 = vand.u32 %v788, 4294901760
    %v790 = vsub.f32 %v788, %v789
    %v791 = vand.u32 %v790, 4294901760
    %792 = vmatpush1.msra.mxu0 %v791
    %793 = vmatprep.subr.mxu0 0.0
    %v794 = vand.u32 %v36, 4294901760
    %v795 = vsub.f32 %v36, %v794
    %v796 = vand.u32 %v795, 4294901760
    %v797 = vsub.f32 %v795, %v796
    %v798 = vand.u32 %v797, 4294901760
    %799 = vmatpush1.msra.mxu0 %v798
    %800 = vmatprep.subr.mxu0 0.0
    %v801 = vand.u32 %v37, 4294901760
    %v802 = vsub.f32 %v37, %v801
    %v803 = vand.u32 %v802, 4294901760
    %v804 = vsub.f32 %v802, %v803
    %v805 = vand.u32 %v804, 4294901760
    %806 = vmatpush1.msra.mxu0 %v805
    %807 = vmatprep.subr.mxu0 0.0
    %v808 = vand.u32 %v38, 4294901760
    %v809 = vsub.f32 %v38, %v808
    %v810 = vand.u32 %v809, 4294901760
    %v811 = vsub.f32 %v809, %v810
    %v812 = vand.u32 %v811, 4294901760
    %813 = vmatpush1.msra.mxu0 %v812
    %814 = vmatprep.subr.mxu0 0.0
    %v815 = vand.u32 %v39, 4294901760
    %v816 = vsub.f32 %v39, %v815
    %v817 = vand.u32 %v816, 4294901760
    %v818 = vsub.f32 %v816, %v817
    %v819 = vand.u32 %v818, 4294901760
    %820 = vmatpush1.msra.mxu0 %v819
    %821 = vmatprep.subr.mxu0 0.0
    %v822 = vand.u32 %v40, 4294901760
    %v823 = vsub.f32 %v40, %v822
    %v824 = vand.u32 %v823, 4294901760
    %v825 = vsub.f32 %v823, %v824
    %v826 = vand.u32 %v825, 4294901760
    %827 = vmatpush1.msra.mxu0 %v826
    %828 = vmatprep.subr.mxu0 0.0
    %v829 = vand.u32 %v41, 4294901760
    %v830 = vsub.f32 %v41, %v829
    %v831 = vand.u32 %v830, 4294901760
    %v832 = vsub.f32 %v830, %v831
    %v833 = vand.u32 %v832, 4294901760
    %834 = vmatpush1.msra.mxu0 %v833
    %835 = vmatprep.subr.mxu0 0.0
    %v836 = vand.u32 %v42, 4294901760
    %v837 = vsub.f32 %v42, %v836
    %v838 = vand.u32 %v837, 4294901760
    %v839 = vsub.f32 %v837, %v838
    %v840 = vand.u32 %v839, 4294901760
    %841 = vmatpush1.msra.mxu0 %v840
    %842 = vmatprep.subr.mxu0 0.0
    %v843 = vand.u32 %v43, 4294901760
    %v844 = vsub.f32 %v43, %v843
    %v845 = vand.u32 %v844, 4294901760
    %v846 = vsub.f32 %v844, %v845
    %v847 = vand.u32 %v846, 4294901760
    %848 = vmatpush1.msra.mxu0 %v847
    %849 = vmatprep.subr.mxu0 0.0
    %v850 = vand.u32 %v44, 4294901760
    %v851 = vsub.f32 %v44, %v850
    %v852 = vand.u32 %v851, 4294901760
    %v853 = vsub.f32 %v851, %v852
    %v854 = vand.u32 %v853, 4294901760
    %855 = vmatpush1.msra.mxu0 %v854
    %856 = vmatprep.subr.mxu0 0.0
    %v857 = vand.u32 %v45, 4294901760
    %v858 = vsub.f32 %v45, %v857
    %v859 = vand.u32 %v858, 4294901760
    %v860 = vsub.f32 %v858, %v859
    %v861 = vand.u32 %v860, 4294901760
    %862 = vmatpush1.msra.mxu0 %v861
    %863 = vmatprep.subr.mxu0 0.0
    %v864 = vand.u32 %v46, 4294901760
    %v865 = vsub.f32 %v46, %v864
    %v866 = vand.u32 %v865, 4294901760
    %v867 = vsub.f32 %v865, %v866
    %v868 = vand.u32 %v867, 4294901760
    %869 = vmatpush1.msra.mxu0 %v868
    %870 = vmatprep.subr.mxu0 0.0
    %v871 = vand.u32 %v47, 4294901760
    %v872 = vsub.f32 %v47, %v871
    %v873 = vand.u32 %v872, 4294901760
    %v874 = vsub.f32 %v872, %v873
    %v875 = vand.u32 %v874, 4294901760
    %876 = vmatpush1.msra.mxu0 %v875
    %877 = vmatprep.subr.mxu0 0.0
    %v878 = vand.u32 %v48, 4294901760
    %v879 = vsub.f32 %v48, %v878
    %v880 = vand.u32 %v879, 4294901760
    %v881 = vsub.f32 %v879, %v880
    %v882 = vand.u32 %v881, 4294901760
    %883 = vmatpush1.msra.mxu0 %v882
    %884 = vmatprep.subr.mxu0 0.0
    %v885 = vand.u32 %v49, 4294901760
    %v886 = vsub.f32 %v49, %v885
    %v887 = vand.u32 %v886, 4294901760
    %v888 = vsub.f32 %v886, %v887
    %v889 = vand.u32 %v888, 4294901760
    %890 = vmatpush1.msra.mxu0 %v889
    %891 = vmatprep.subr.mxu0 0.0
    %v892 = vand.u32 %v50, 4294901760
    %v893 = vsub.f32 %v50, %v892
    %v894 = vand.u32 %v893, 4294901760
    %v895 = vsub.f32 %v893, %v894
    %v896 = vand.u32 %v895, 4294901760
    %897 = vmatpush1.msra.mxu0 %v896
    %898 = vmatprep.subr.mxu0 0.0
    %899 = vmatpush1.msra.mxu0 0.0
    %900 = vmatprep.subr.mxu0 0.0
    %901 = vmatpush1.msra.mxu0 0.0
    %902 = vmatprep.subr.mxu0 0.0
    %903 = vmatpush1.msra.mxu0 0.0
    %904 = vmatprep.subr.mxu0 0.0
    %905 = vmatpush1.msra.mxu0 0.0
    %906 = vmatprep.subr.mxu0 0.0
    %907 = vmatpush1.msra.mxu0 0.0
    %908 = vmatprep.subr.mxu0 0.0
    %909 = vmatpush1.msra.mxu0 0.0
    %910 = vmatprep.subr.mxu0 0.0
    %911 = vmatpush1.msra.mxu0 0.0
    %912 = vmatprep.subr.mxu0 0.0
    %913 = vmatpush1.msra.mxu0 0.0
    %914 = vmatprep.subr.mxu0 0.0
    %915 = vmatpush1.msra.mxu0 0.0
    %916 = vmatprep.subr.mxu0 0.0
    %917 = vmatpush1.msra.mxu0 0.0
    %918 = vmatprep.subr.mxu0 0.0
    %919 = vmatpush1.msra.mxu0 0.0
    %920 = vmatprep.subr.mxu0 0.0
    %921 = vmatpush1.msra.mxu0 0.0
    %922 = vmatprep.subr.mxu0 0.0
    %923 = vmatpush1.msra.mxu0 0.0
    %924 = vmatprep.subr.mxu0 0.0
    %925 = vmatpush1.msra.mxu0 0.0
    %926 = vmatprep.subr.mxu0 0.0
    %927 = vmatpush1.msra.mxu0 0.0
    %928 = vmatprep.subr.mxu0 0.0
    %929 = vmatpush1.msra.mxu0 0.0
    %930 = vmatprep.mubr.f32.mxu0 0.0
    %v931 = vand.u32 %v694, 4294901760
    %932 = vmatmul.mubr.f32.gmra.mrb[0].mxu0 %v931
    %v933 = vpop.f32.mrb[0].mxu0
    %v934 = vadd.f32 %v783, %v933
    %v935 = vpop.f32.mrb[0].mxu0
    %936 = vdwg.mxu0
    %937 = vmatprep.subr.mxu0 0.0
    %v938 = vand.u32 %v35, 4294901760
    %v939 = vsub.f32 %v35, %v938
    %940 = vmatpush1.msra.mxu0 %v939
    %941 = vmatprep.subr.mxu0 0.0
    %v942 = vand.u32 %v36, 4294901760
    %v943 = vsub.f32 %v36, %v942
    %944 = vmatpush1.msra.mxu0 %v943
    %945 = vmatprep.subr.mxu0 0.0
    %v946 = vand.u32 %v37, 4294901760
    %v947 = vsub.f32 %v37, %v946
    %948 = vmatpush1.msra.mxu0 %v947
    %949 = vmatprep.subr.mxu0 0.0
    %v950 = vand.u32 %v38, 4294901760
    %v951 = vsub.f32 %v38, %v950
    %952 = vmatpush1.msra.mxu0 %v951
    %953 = vmatprep.subr.mxu0 0.0
    %v954 = vand.u32 %v39, 4294901760
    %v955 = vsub.f32 %v39, %v954
    %956 = vmatpush1.msra.mxu0 %v955
    %957 = vmatprep.subr.mxu0 0.0
    %v958 = vand.u32 %v40, 4294901760
    %v959 = vsub.f32 %v40, %v958
    %960 = vmatpush1.msra.mxu0 %v959
    %961 = vmatprep.subr.mxu0 0.0
    %v962 = vand.u32 %v41, 4294901760
    %v963 = vsub.f32 %v41, %v962
    %964 = vmatpush1.msra.mxu0 %v963
    %965 = vmatprep.subr.mxu0 0.0
    %v966 = vand.u32 %v42, 4294901760
    %v967 = vsub.f32 %v42, %v966
    %968 = vmatpush1.msra.mxu0 %v967
    %969 = vmatprep.subr.mxu0 0.0
    %v970 = vand.u32 %v43, 4294901760
    %v971 = vsub.f32 %v43, %v970
    %972 = vmatpush1.msra.mxu0 %v971
    %973 = vmatprep.subr.mxu0 0.0
    %v974 = vand.u32 %v44, 4294901760
    %v975 = vsub.f32 %v44, %v974
    %976 = vmatpush1.msra.mxu0 %v975
    %977 = vmatprep.subr.mxu0 0.0
    %v978 = vand.u32 %v45, 4294901760
    %v979 = vsub.f32 %v45, %v978
    %980 = vmatpush1.msra.mxu0 %v979
    %981 = vmatprep.subr.mxu0 0.0
    %v982 = vand.u32 %v46, 4294901760
    %v983 = vsub.f32 %v46, %v982
    %984 = vmatpush1.msra.mxu0 %v983
    %985 = vmatprep.subr.mxu0 0.0
    %v986 = vand.u32 %v47, 4294901760
    %v987 = vsub.f32 %v47, %v986
    %988 = vmatpush1.msra.mxu0 %v987
    %989 = vmatprep.subr.mxu0 0.0
    %v990 = vand.u32 %v48, 4294901760
    %v991 = vsub.f32 %v48, %v990
    %992 = vmatpush1.msra.mxu0 %v991
    %993 = vmatprep.subr.mxu0 0.0
    %v994 = vand.u32 %v49, 4294901760
    %v995 = vsub.f32 %v49, %v994
    %996 = vmatpush1.msra.mxu0 %v995
    %997 = vmatprep.subr.mxu0 0.0
    %v998 = vand.u32 %v50, 4294901760
    %v999 = vsub.f32 %v50, %v998
    %1000 = vmatpush1.msra.mxu0 %v999
    %1001 = vmatprep.subr.mxu0 0.0
    %1002 = vmatpush1.msra.mxu0 0.0
    %1003 = vmatprep.subr.mxu0 0.0
    %1004 = vmatpush1.msra.mxu0 0.0
    %1005 = vmatprep.subr.mxu0 0.0
    %1006 = vmatpush1.msra.mxu0 0.0
    %1007 = vmatprep.subr.mxu0 0.0
    %1008 = vmatpush1.msra.mxu0 0.0
    %1009 = vmatprep.subr.mxu0 0.0
    %1010 = vmatpush1.msra.mxu0 0.0
    %1011 = vmatprep.subr.mxu0 0.0
    %1012 = vmatpush1.msra.mxu0 0.0
    %1013 = vmatprep.subr.mxu0 0.0
    %1014 = vmatpush1.msra.mxu0 0.0
    %1015 = vmatprep.subr.mxu0 0.0
    %1016 = vmatpush1.msra.mxu0 0.0
    %1017 = vmatprep.subr.mxu0 0.0
    %1018 = vmatpush1.msra.mxu0 0.0
    %1019 = vmatprep.subr.mxu0 0.0
    %1020 = vmatpush1.msra.mxu0 0.0
    %1021 = vmatprep.subr.mxu0 0.0
    %1022 = vmatpush1.msra.mxu0 0.0
    %1023 = vmatprep.subr.mxu0 0.0
    %1024 = vmatpush1.msra.mxu0 0.0
    %1025 = vmatprep.subr.mxu0 0.0
    %1026 = vmatpush1.msra.mxu0 0.0
    %1027 = vmatprep.subr.mxu0 0.0
    %1028 = vmatpush1.msra.mxu0 0.0
    %1029 = vmatprep.subr.mxu0 0.0
    %1030 = vmatpush1.msra.mxu0 0.0
    %1031 = vmatprep.subr.mxu0 0.0
    %1032 = vmatpush1.msra.mxu0 0.0
    %1033 = vmatprep.mubr.f32.mxu0 0.0
    %v1034 = vand.u32 %v694, 4294901760
    %v1035 = vsub.f32 %v694, %v1034
    %1036 = vmatmul.mubr.f32.gmra.mrb[0].mxu0 %v1035
    %v1037 = vpop.f32.mrb[0].mxu0
    %v1038 = vadd.f32 %v934, %v1037
    %v1039 = vpop.f32.mrb[0].mxu0
    %1040 = vdwg.mxu0
    %1041 = vmatprep.subr.mxu0 0.0
    %v1042 = vand.u32 %v35, 4294901760
    %1043 = vmatpush1.msra.mxu0 %v1042
    %1044 = vmatprep.subr.mxu0 0.0
    %v1045 = vand.u32 %v36, 4294901760
    %1046 = vmatpush1.msra.mxu0 %v1045
    %1047 = vmatprep.subr.mxu0 0.0
    %v1048 = vand.u32 %v37, 4294901760
    %1049 = vmatpush1.msra.mxu0 %v1048
    %1050 = vmatprep.subr.mxu0 0.0
    %v1051 = vand.u32 %v38, 4294901760
    %1052 = vmatpush1.msra.mxu0 %v1051
    %1053 = vmatprep.subr.mxu0 0.0
    %v1054 = vand.u32 %v39, 4294901760
    %1055 = vmatpush1.msra.mxu0 %v1054
    %1056 = vmatprep.subr.mxu0 0.0
    %v1057 = vand.u32 %v40, 4294901760
    %1058 = vmatpush1.msra.mxu0 %v1057
    %1059 = vmatprep.subr.mxu0 0.0
    %v1060 = vand.u32 %v41, 4294901760
    %1061 = vmatpush1.msra.mxu0 %v1060
    %1062 = vmatprep.subr.mxu0 0.0
    %v1063 = vand.u32 %v42, 4294901760
    %1064 = vmatpush1.msra.mxu0 %v1063
    %1065 = vmatprep.subr.mxu0 0.0
    %v1066 = vand.u32 %v43, 4294901760
    %1067 = vmatpush1.msra.mxu0 %v1066
    %1068 = vmatprep.subr.mxu0 0.0
    %v1069 = vand.u32 %v44, 4294901760
    %1070 = vmatpush1.msra.mxu0 %v1069
    %1071 = vmatprep.subr.mxu0 0.0
    %v1072 = vand.u32 %v45, 4294901760
    %1073 = vmatpush1.msra.mxu0 %v1072
    %1074 = vmatprep.subr.mxu0 0.0
    %v1075 = vand.u32 %v46, 4294901760
    %1076 = vmatpush1.msra.mxu0 %v1075
    %1077 = vmatprep.subr.mxu0 0.0
    %v1078 = vand.u32 %v47, 4294901760
    %1079 = vmatpush1.msra.mxu0 %v1078
    %1080 = vmatprep.subr.mxu0 0.0
    %v1081 = vand.u32 %v48, 4294901760
    %1082 = vmatpush1.msra.mxu0 %v1081
    %1083 = vmatprep.subr.mxu0 0.0
    %v1084 = vand.u32 %v49, 4294901760
    %1085 = vmatpush1.msra.mxu0 %v1084
    %1086 = vmatprep.subr.mxu0 0.0
    %v1087 = vand.u32 %v50, 4294901760
    %1088 = vmatpush1.msra.mxu0 %v1087
    %1089 = vmatprep.subr.mxu0 0.0
    %1090 = vmatpush1.msra.mxu0 0.0
    %1091 = vmatprep.subr.mxu0 0.0
    %1092 = vmatpush1.msra.mxu0 0.0
    %1093 = vmatprep.subr.mxu0 0.0
    %1094 = vmatpush1.msra.mxu0 0.0
    %1095 = vmatprep.subr.mxu0 0.0
    %1096 = vmatpush1.msra.mxu0 0.0
    %1097 = vmatprep.subr.mxu0 0.0
    %1098 = vmatpush1.msra.mxu0 0.0
    %1099 = vmatprep.subr.mxu0 0.0
    %1100 = vmatpush1.msra.mxu0 0.0
    %1101 = vmatprep.subr.mxu0 0.0
    %1102 = vmatpush1.msra.mxu0 0.0
    %1103 = vmatprep.subr.mxu0 0.0
    %1104 = vmatpush1.msra.mxu0 0.0
    %1105 = vmatprep.subr.mxu0 0.0
    %1106 = vmatpush1.msra.mxu0 0.0
    %1107 = vmatprep.subr.mxu0 0.0
    %1108 = vmatpush1.msra.mxu0 0.0
    %1109 = vmatprep.subr.mxu0 0.0
    %1110 = vmatpush1.msra.mxu0 0.0
    %1111 = vmatprep.subr.mxu0 0.0
    %1112 = vmatpush1.msra.mxu0 0.0
    %1113 = vmatprep.subr.mxu0 0.0
    %1114 = vmatpush1.msra.mxu0 0.0
    %1115 = vmatprep.subr.mxu0 0.0
    %1116 = vmatpush1.msra.mxu0 0.0
    %1117 = vmatprep.subr.mxu0 0.0
    %1118 = vmatpush1.msra.mxu0 0.0
    %1119 = vmatprep.subr.mxu0 0.0
    %1120 = vmatpush1.msra.mxu0 0.0
    %1121 = vmatprep.mubr.f32.mxu0 0.0
    %v1122 = vand.u32 %v694, 4294901760
    %v1123 = vsub.f32 %v694, %v1122
    %v1124 = vand.u32 %v1123, 4294901760
    %1125 = vmatmul.mubr.f32.gmra.mrb[0].mxu0 %v1124
    %v1126 = vpop.f32.mrb[0].mxu0
    %v1127 = vadd.f32 %v1038, %v1126
    %v1128 = vpop.f32.mrb[0].mxu0
    %1129 = vdwg.mxu0
    %1130 = vmatprep.subr.mxu0 0.0
    %v1131 = vand.u32 %v35, 4294901760
    %v1132 = vsub.f32 %v35, %v1131
    %v1133 = vand.u32 %v1132, 4294901760
    %1134 = vmatpush1.msra.mxu0 %v1133
    %1135 = vmatprep.subr.mxu0 0.0
    %v1136 = vand.u32 %v36, 4294901760
    %v1137 = vsub.f32 %v36, %v1136
    %v1138 = vand.u32 %v1137, 4294901760
    %1139 = vmatpush1.msra.mxu0 %v1138
    %1140 = vmatprep.subr.mxu0 0.0
    %v1141 = vand.u32 %v37, 4294901760
    %v1142 = vsub.f32 %v37, %v1141
    %v1143 = vand.u32 %v1142, 4294901760
    %1144 = vmatpush1.msra.mxu0 %v1143
    %1145 = vmatprep.subr.mxu0 0.0
    %v1146 = vand.u32 %v38, 4294901760
    %v1147 = vsub.f32 %v38, %v1146
    %v1148 = vand.u32 %v1147, 4294901760
    %1149 = vmatpush1.msra.mxu0 %v1148
    %1150 = vmatprep.subr.mxu0 0.0
    %v1151 = vand.u32 %v39, 4294901760
    %v1152 = vsub.f32 %v39, %v1151
    %v1153 = vand.u32 %v1152, 4294901760
    %1154 = vmatpush1.msra.mxu0 %v1153
    %1155 = vmatprep.subr.mxu0 0.0
    %v1156 = vand.u32 %v40, 4294901760
    %v1157 = vsub.f32 %v40, %v1156
    %v1158 = vand.u32 %v1157, 4294901760
    %1159 = vmatpush1.msra.mxu0 %v1158
    %1160 = vmatprep.subr.mxu0 0.0
    %v1161 = vand.u32 %v41, 4294901760
    %v1162 = vsub.f32 %v41, %v1161
    %v1163 = vand.u32 %v1162, 4294901760
    %1164 = vmatpush1.msra.mxu0 %v1163
    %1165 = vmatprep.subr.mxu0 0.0
    %v1166 = vand.u32 %v42, 4294901760
    %v1167 = vsub.f32 %v42, %v1166
    %v1168 = vand.u32 %v1167, 4294901760
    %1169 = vmatpush1.msra.mxu0 %v1168
    %1170 = vmatprep.subr.mxu0 0.0
    %v1171 = vand.u32 %v43, 4294901760
    %v1172 = vsub.f32 %v43, %v1171
    %v1173 = vand.u32 %v1172, 4294901760
    %1174 = vmatpush1.msra.mxu0 %v1173
    %1175 = vmatprep.subr.mxu0 0.0
    %v1176 = vand.u32 %v44, 4294901760
    %v1177 = vsub.f32 %v44, %v1176
    %v1178 = vand.u32 %v1177, 4294901760
    %1179 = vmatpush1.msra.mxu0 %v1178
    %1180 = vmatprep.subr.mxu0 0.0
    %v1181 = vand.u32 %v45, 4294901760
    %v1182 = vsub.f32 %v45, %v1181
    %v1183 = vand.u32 %v1182, 4294901760
    %1184 = vmatpush1.msra.mxu0 %v1183
    %1185 = vmatprep.subr.mxu0 0.0
    %v1186 = vand.u32 %v46, 4294901760
    %v1187 = vsub.f32 %v46, %v1186
    %v1188 = vand.u32 %v1187, 4294901760
    %1189 = vmatpush1.msra.mxu0 %v1188
    %1190 = vmatprep.subr.mxu0 0.0
    %v1191 = vand.u32 %v47, 4294901760
    %v1192 = vsub.f32 %v47, %v1191
    %v1193 = vand.u32 %v1192, 4294901760
    %1194 = vmatpush1.msra.mxu0 %v1193
    %1195 = vmatprep.subr.mxu0 0.0
    %v1196 = vand.u32 %v48, 4294901760
    %v1197 = vsub.f32 %v48, %v1196
    %v1198 = vand.u32 %v1197, 4294901760
    %1199 = vmatpush1.msra.mxu0 %v1198
    %1200 = vmatprep.subr.mxu0 0.0
    %v1201 = vand.u32 %v49, 4294901760
    %v1202 = vsub.f32 %v49, %v1201
    %v1203 = vand.u32 %v1202, 4294901760
    %1204 = vmatpush1.msra.mxu0 %v1203
    %1205 = vmatprep.subr.mxu0 0.0
    %v1206 = vand.u32 %v50, 4294901760
    %v1207 = vsub.f32 %v50, %v1206
    %v1208 = vand.u32 %v1207, 4294901760
    %1209 = vmatpush1.msra.mxu0 %v1208
    %1210 = vmatprep.subr.mxu0 0.0
    %1211 = vmatpush1.msra.mxu0 0.0
    %1212 = vmatprep.subr.mxu0 0.0
    %1213 = vmatpush1.msra.mxu0 0.0
    %1214 = vmatprep.subr.mxu0 0.0
    %1215 = vmatpush1.msra.mxu0 0.0
    %1216 = vmatprep.subr.mxu0 0.0
    %1217 = vmatpush1.msra.mxu0 0.0
    %1218 = vmatprep.subr.mxu0 0.0
    %1219 = vmatpush1.msra.mxu0 0.0
    %1220 = vmatprep.subr.mxu0 0.0
    %1221 = vmatpush1.msra.mxu0 0.0
    %1222 = vmatprep.subr.mxu0 0.0
    %1223 = vmatpush1.msra.mxu0 0.0
    %1224 = vmatprep.subr.mxu0 0.0
    %1225 = vmatpush1.msra.mxu0 0.0
    %1226 = vmatprep.subr.mxu0 0.0
    %1227 = vmatpush1.msra.mxu0 0.0
    %1228 = vmatprep.subr.mxu0 0.0
    %1229 = vmatpush1.msra.mxu0 0.0
    %1230 = vmatprep.subr.mxu0 0.0
    %1231 = vmatpush1.msra.mxu0 0.0
    %1232 = vmatprep.subr.mxu0 0.0
    %1233 = vmatpush1.msra.mxu0 0.0
    %1234 = vmatprep.subr.mxu0 0.0
    %1235 = vmatpush1.msra.mxu0 0.0
    %1236 = vmatprep.subr.mxu0 0.0
    %1237 = vmatpush1.msra.mxu0 0.0
    %1238 = vmatprep.subr.mxu0 0.0
    %1239 = vmatpush1.msra.mxu0 0.0
    %1240 = vmatprep.subr.mxu0 0.0
    %1241 = vmatpush1.msra.mxu0 0.0
    %1242 = vmatprep.mubr.f32.mxu0 0.0
    %v1243 = vand.u32 %v694, 4294901760
    %1244 = vmatmul.mubr.f32.gmra.mrb[0].mxu0 %v1243
    %v1245 = vpop.f32.mrb[0].mxu0
    %v1246 = vadd.f32 %v1127, %v1245
    %v1247 = vpop.f32.mrb[0].mxu0
    %1248 = vdwg.mxu0
    %1249 = vmatprep.subr.mxu0 0.0
    %v1250 = vand.u32 %v35, 4294901760
    %1251 = vmatpush1.msra.mxu0 %v1250
    %1252 = vmatprep.subr.mxu0 0.0
    %v1253 = vand.u32 %v36, 4294901760
    %1254 = vmatpush1.msra.mxu0 %v1253
    %1255 = vmatprep.subr.mxu0 0.0
    %v1256 = vand.u32 %v37, 4294901760
    %1257 = vmatpush1.msra.mxu0 %v1256
    %1258 = vmatprep.subr.mxu0 0.0
    %v1259 = vand.u32 %v38, 4294901760
    %1260 = vmatpush1.msra.mxu0 %v1259
    %1261 = vmatprep.subr.mxu0 0.0
    %v1262 = vand.u32 %v39, 4294901760
    %1263 = vmatpush1.msra.mxu0 %v1262
    %1264 = vmatprep.subr.mxu0 0.0
    %v1265 = vand.u32 %v40, 4294901760
    %1266 = vmatpush1.msra.mxu0 %v1265
    %1267 = vmatprep.subr.mxu0 0.0
    %v1268 = vand.u32 %v41, 4294901760
    %1269 = vmatpush1.msra.mxu0 %v1268
    %1270 = vmatprep.subr.mxu0 0.0
    %v1271 = vand.u32 %v42, 4294901760
    %1272 = vmatpush1.msra.mxu0 %v1271
    %1273 = vmatprep.subr.mxu0 0.0
    %v1274 = vand.u32 %v43, 4294901760
    %1275 = vmatpush1.msra.mxu0 %v1274
    %1276 = vmatprep.subr.mxu0 0.0
    %v1277 = vand.u32 %v44, 4294901760
    %1278 = vmatpush1.msra.mxu0 %v1277
    %1279 = vmatprep.subr.mxu0 0.0
    %v1280 = vand.u32 %v45, 4294901760
    %1281 = vmatpush1.msra.mxu0 %v1280
    %1282 = vmatprep.subr.mxu0 0.0
    %v1283 = vand.u32 %v46, 4294901760
    %1284 = vmatpush1.msra.mxu0 %v1283
    %1285 = vmatprep.subr.mxu0 0.0
    %v1286 = vand.u32 %v47, 4294901760
    %1287 = vmatpush1.msra.mxu0 %v1286
    %1288 = vmatprep.subr.mxu0 0.0
    %v1289 = vand.u32 %v48, 4294901760
    %1290 = vmatpush1.msra.mxu0 %v1289
    %1291 = vmatprep.subr.mxu0 0.0
    %v1292 = vand.u32 %v49, 4294901760
    %1293 = vmatpush1.msra.mxu0 %v1292
    %1294 = vmatprep.subr.mxu0 0.0
    %v1295 = vand.u32 %v50, 4294901760
    %1296 = vmatpush1.msra.mxu0 %v1295
    %1297 = vmatprep.subr.mxu0 0.0
    %1298 = vmatpush1.msra.mxu0 0.0
    %1299 = vmatprep.subr.mxu0 0.0
    %1300 = vmatpush1.msra.mxu0 0.0
    %1301 = vmatprep.subr.mxu0 0.0
    %1302 = vmatpush1.msra.mxu0 0.0
    %1303 = vmatprep.subr.mxu0 0.0
    %1304 = vmatpush1.msra.mxu0 0.0
    %1305 = vmatprep.subr.mxu0 0.0
    %1306 = vmatpush1.msra.mxu0 0.0
    %1307 = vmatprep.subr.mxu0 0.0
    %1308 = vmatpush1.msra.mxu0 0.0
    %1309 = vmatprep.subr.mxu0 0.0
    %1310 = vmatpush1.msra.mxu0 0.0
    %1311 = vmatprep.subr.mxu0 0.0
    %1312 = vmatpush1.msra.mxu0 0.0
    %1313 = vmatprep.subr.mxu0 0.0
    %1314 = vmatpush1.msra.mxu0 0.0
    %1315 = vmatprep.subr.mxu0 0.0
    %1316 = vmatpush1.msra.mxu0 0.0
    %1317 = vmatprep.subr.mxu0 0.0
    %1318 = vmatpush1.msra.mxu0 0.0
    %1319 = vmatprep.subr.mxu0 0.0
    %1320 = vmatpush1.msra.mxu0 0.0
    %1321 = vmatprep.subr.mxu0 0.0
    %1322 = vmatpush1.msra.mxu0 0.0
    %1323 = vmatprep.subr.mxu0 0.0
    %1324 = vmatpush1.msra.mxu0 0.0
    %1325 = vmatprep.subr.mxu0 0.0
    %1326 = vmatpush1.msra.mxu0 0.0
    %1327 = vmatprep.subr.mxu0 0.0
    %1328 = vmatpush1.msra.mxu0 0.0
    %1329 = vmatprep.mubr.f32.mxu0 0.0
    %v1330 = vand.u32 %v694, 4294901760
    %1331 = vmatmul.mubr.f32.gmra.mrb[0].mxu0 %v1330
    %v1332 = vpop.f32.mrb[0].mxu0
    %v1333 = vadd.f32 %v1246, %v1332
    %v1334 = vpop.f32.mrb[0].mxu0
    %1335 = vdwg.mxu0
    %v1336 = vmul.f32 %v1333, 0.032258064
    %s1337 = sld [smem:[#allocation2]]
    %v1338 = vadd.f32 %v1336, 1e-06
    %v1339 = vrsqrt.pop %v1338
    %v1340 = vstv %s1337
    %v1341 = vmul.f32 %v1340, %v1339
    %v1342 = vmul.f32 %v693, %v1341
    %s1343 = sld [smem:[#allocation3]]
    %v1344 = vstv %s1343
    %v1345 = vadd.f32 %v1342, %v1344
    %1346 = vst [vmem:[#allocation7] sm:$0xf] %v1345
    // Predicated region
    $region22: #{tpu_custom_call.1} parent=1 // pred_check
      _
    $region23: #{tpu_custom_call.1} parent=1 // pred_check_branch
      %1348 = sbr.rel (0) target = $region25
    $region24: #{tpu_custom_call.1} parent=1 // pred_region
      %s1350 = ssub.s32 64, 64
      %1351 = vsyncadd [#allocation6], %s1350
      %s1353 = sshll.u32 [#allocation7], 4
      %s1354 = int_to_ptr.vmem [resolvable:$true] %s1353
      %1356 = dma.vmem_to_hbm [thread:$0]  %s1354, 64, %s4, [#allocation6]
    $region25: #{tpu_custom_call.1} parent=1 // pred_fallthru
      _
    // Predicated region
    $region26: #{tpu_custom_call.1} parent=1 // pred_check
      _
    $region27: #{tpu_custom_call.1} parent=1 // pred_check_branch
      %1358 = sbr.rel (0) target = $region29
    $region28: #{tpu_custom_call.1} parent=1 // pred_region
      %1359 = dma.done [#allocation6], 64
    $region29: #{tpu_custom_call.1} parent=1 // pred_fallthru
      _
    %1360 = vsyncpa [#allocation5], 1
    %1361 = vsyncpa [#allocation6], 1

</llo_original>
